<compile_context>
chip_gen: v7x
topology: tpu7x:2x2x1
jax: 0.10.0
libtpu: 0.0.40
codegen_flags: <defaults>
</compile_context>

<pallas_src>
import math

import jax
import jax.numpy as jnp
import numpy as np
from jax.experimental import pallas as pl
from jax.experimental.pallas import tpu as pltpu

_LANE = 128


def _tss_sums_kernel(yp_ref, yt_ref, spt_ref, sp_ref, st_ref):
    i = pl.program_id(0)

    # Zero the resident accumulators on the first row-tile.
    @pl.when(i == 0)
    def _():
        spt_ref[...] = jnp.zeros_like(spt_ref)
        sp_ref[...] = jnp.zeros_like(sp_ref)
        st_ref[...] = jnp.zeros_like(st_ref)

    yp = yp_ref[...].astype(jnp.float32)
    yt = yt_ref[...].astype(jnp.float32)

    # Per-column partial sums over this row tile (reduction over dim 0).
    spt_ref[...] += jnp.sum(yp * yt, axis=0, keepdims=True)
    sp_ref[...] += jnp.sum(yp, axis=0, keepdims=True)
    st_ref[...] += jnp.sum(yt, axis=0, keepdims=True)


def _round_up(x: int, m: int) -> int:
    return ((x + m - 1) // m) * m


def _vmem_capacity_bytes() -> int:
    try:
        cap = getattr(pltpu.get_tpu_info(), "vmem_capacity_bytes", None)
        if cap:
            return int(cap)
    except Exception:
        pass
    return 64 * 1024 * 1024  # conservative fallback: v7x per-TensorCore VMEM


def tss(y_pred: jax.Array, y_true: jax.Array, *, epsilon: float = 1e-07) -> jax.Array:
    """TSS over (N, C) inputs; reduces rows, returns (C,) float32."""
    assert y_pred.ndim == 2 and y_true.shape == y_pred.shape
    n, c = y_pred.shape

    # --- lane-dense fold: (N, C) -> (N/k, k*C) with (k*C) % 128 == 0 --------
    k = 1 if c % _LANE == 0 else _LANE // math.gcd(c, _LANE)
    c_eff = k * c
    n_fold = -(-n // k)  # ceil(n / k)

    # --- row-tile size from per-generation VMEM budget ----------------------
    itemsize = y_pred.dtype.itemsize + y_true.dtype.itemsize  # both inputs, per element
    vmem_cap = _vmem_capacity_bytes()
    # Budget for the 2x-pipeline-buffered input blocks; capped so it also fits
    # comfortably on v7x's 64 MiB per-TC VMEM.
    budget = min(int(vmem_cap * 0.6), 48 * 1024 * 1024)
    tm_max = budget // (2 * c_eff * itemsize)      # 2 pipeline buffers
    tm_max = max(8, (tm_max // 8) * 8)

    n_fold_8 = _round_up(n_fold, 8)
    num_blocks = -(-n_fold_8 // tm_max)            # cdiv -> balances blocks, bounds padding
    tm = _round_up(-(-n_fold_8 // num_blocks), 8)
    n_fold_pad = tm * num_blocks
    grid = (num_blocks,)

    # --- pad ragged rows with zeros (zeros do not perturb the sums) ---------
    rows_needed = n_fold_pad * k
    yp, yt = y_pred, y_true
    if rows_needed != n:
        pad = rows_needed - n
        yp = jnp.pad(yp, ((0, pad), (0, 0)))
        yt = jnp.pad(yt, ((0, pad), (0, 0)))
    yp = yp.reshape(n_fold_pad, c_eff)  # free, contiguous row-major reshape
    yt = yt.reshape(n_fold_pad, c_eff)

    vmem_need = 2 * tm * c_eff * itemsize + 6 * 8 * c_eff * 4  # inputs (2-buf) + outputs
    vmem_limit = int(min(max(vmem_need + (8 << 20), 32 << 20), vmem_cap * 0.9))

    spt, sp, st = pl.pallas_call(
        _tss_sums_kernel,
        out_shape=(
            jax.ShapeDtypeStruct((1, c_eff), jnp.float32),
            jax.ShapeDtypeStruct((1, c_eff), jnp.float32),
            jax.ShapeDtypeStruct((1, c_eff), jnp.float32),
        ),
        grid_spec=pltpu.PrefetchScalarGridSpec(
            num_scalar_prefetch=0,
            grid=grid,
            in_specs=[
                pl.BlockSpec((tm, c_eff), lambda i: (i, 0)),
                pl.BlockSpec((tm, c_eff), lambda i: (i, 0)),
            ],
            out_specs=[
                pl.BlockSpec((1, c_eff), lambda i: (0, 0)),
                pl.BlockSpec((1, c_eff), lambda i: (0, 0)),
                pl.BlockSpec((1, c_eff), lambda i: (0, 0)),
            ],
        ),
        compiler_params=pltpu.CompilerParams(
            dimension_semantics=("arbitrary",),
            vmem_limit_bytes=vmem_limit,
        ),
    )(yp, yt)

    # --- fold (k*C,) accumulators back to (C,) and finalize (O(C), tiny) ----
    s_pt = spt.reshape(k, c).sum(axis=0)
    s_p = sp.reshape(k, c).sum(axis=0)
    s_t = st.reshape(k, c).sum(axis=0)

    tp = s_pt
    fn = s_t - s_pt
    fp = s_p - s_pt
    tn = jnp.float32(n) - s_t - s_p + s_pt
    first = tp / (tp + fn + epsilon)
    second = fp / (fp + tn + epsilon)
    return (first - second).astype(jnp.float32)


def _tss_ref(y_pred, y_true, epsilon=1e-07):
    tp = (y_true * y_pred).sum(axis=0).astype(jnp.float32)
    tn = ((1 - y_true) * (1 - y_pred)).sum(axis=0).astype(jnp.float32)
    fp = ((1 - y_true) * y_pred).sum(axis=0).astype(jnp.float32)
    fn = (y_true * (1 - y_pred)).sum(axis=0).astype(jnp.float32)
    first = tp / (tp + fn + epsilon)
    second = fp / (fp + tn + epsilon)
    return first - second


if __name__ == "__main__":
    key = jax.random.PRNGKey(0)
    k1, k2 = jax.random.split(key)
    N, C = 16, 32  # small 2-D shapes consistent with the module's forward
    y_pred = jax.random.uniform(k1, (N, C), dtype=jnp.float32)
    y_true = (jax.random.uniform(k2, (N, C)) > 0.5).astype(jnp.float32)

    out = jax.block_until_ready(tss(y_pred, y_true))

    ref = _tss_ref(y_pred, y_true)
    np.testing.assert_allclose(np.asarray(out), np.asarray(ref), rtol=1e-5, atol=1e-5)

    print("KERNEL_OK")
</pallas_src>

<mosaic_0001>
module attributes {stable_mosaic.version = 11 : i64} {
  func.func @_tss_sums_kernel(%arg0: i32, %arg1: memref<8x128xf32, #tpu.memory_space<vmem>>, %arg2: memref<8x128xf32, #tpu.memory_space<vmem>>, %arg3: memref<1x128xf32, #tpu.memory_space<vmem>>, %arg4: memref<1x128xf32, #tpu.memory_space<vmem>>, %arg5: memref<1x128xf32, #tpu.memory_space<vmem>>) attributes {dimension_semantics = [#tpu.dimension_semantics<arbitrary>], iteration_bounds = array<i64: 1>, scalar_prefetch = 0 : i64, scratch_operands = 0 : i64, tpu.core_type = #tpu.core_type<tc>, window_params = [{transform_indices = @transform_0, window_bounds = array<i64: 8, 128>}, {transform_indices = @transform_1, window_bounds = array<i64: 8, 128>}, {pipeline_mode = #tpu.pipeline_mode<synchronous>, transform_indices = @transform_2, window_bounds = array<i64: 1, 128>}, {pipeline_mode = #tpu.pipeline_mode<synchronous>, transform_indices = @transform_3, window_bounds = array<i64: 1, 128>}, {pipeline_mode = #tpu.pipeline_mode<synchronous>, transform_indices = @transform_4, window_bounds = array<i64: 1, 128>}]} {
    %c0_i32 = arith.constant 0 : i32
    %0 = arith.cmpi eq, %arg0, %c0_i32 : i32
    %1 = arith.extui %0 : i1 to i32
    %c0_i32_0 = arith.constant 0 : i32
    %2 = arith.cmpi ne, %1, %c0_i32_0 : i32
    scf.if %2 {
      %cst_18 = arith.constant 0.000000e+00 : f32
      %21 = vector.broadcast %cst_18 : f32 to vector<1x128xf32>
      %c0_19 = arith.constant 0 : index
      %c0_20 = arith.constant 0 : index
      %22 = vector.load %arg3[%c0_19, %c0_20] : memref<1x128xf32, #tpu.memory_space<vmem>>, vector<1x128xf32>
      tpu.vector_store %arg3[%c0_19, %c0_20], %21 {strides = array<i32>} : memref<1x128xf32, #tpu.memory_space<vmem>>, vector<1x128xf32>,
      %cst_21 = arith.constant 0.000000e+00 : f32
      %23 = vector.broadcast %cst_21 : f32 to vector<1x128xf32>
      %c0_22 = arith.constant 0 : index
      %c0_23 = arith.constant 0 : index
      %24 = vector.load %arg4[%c0_22, %c0_23] : memref<1x128xf32, #tpu.memory_space<vmem>>, vector<1x128xf32>
      tpu.vector_store %arg4[%c0_22, %c0_23], %23 {strides = array<i32>} : memref<1x128xf32, #tpu.memory_space<vmem>>, vector<1x128xf32>,
      %cst_24 = arith.constant 0.000000e+00 : f32
      %25 = vector.broadcast %cst_24 : f32 to vector<1x128xf32>
      %c0_25 = arith.constant 0 : index
      %c0_26 = arith.constant 0 : index
      %26 = vector.load %arg5[%c0_25, %c0_26] : memref<1x128xf32, #tpu.memory_space<vmem>>, vector<1x128xf32>
      tpu.vector_store %arg5[%c0_25, %c0_26], %25 {strides = array<i32>} : memref<1x128xf32, #tpu.memory_space<vmem>>, vector<1x128xf32>,
    } else {
    }
    %c0 = arith.constant 0 : index
    %c0_1 = arith.constant 0 : index
    %3 = vector.load %arg1[%c0, %c0_1] : memref<8x128xf32, #tpu.memory_space<vmem>>, vector<8x128xf32>
    %c0_2 = arith.constant 0 : index
    %c0_3 = arith.constant 0 : index
    %4 = vector.load %arg2[%c0_2, %c0_3] : memref<8x128xf32, #tpu.memory_space<vmem>>, vector<8x128xf32>
    %c0_4 = arith.constant 0 : index
    %c0_5 = arith.constant 0 : index
    %5 = vector.load %arg3[%c0_4, %c0_5] : memref<1x128xf32, #tpu.memory_space<vmem>>, vector<1x128xf32>
    %6 = arith.mulf %3, %4 : vector<8x128xf32>
    %cst = arith.constant dense<0.000000e+00> : vector<128xf32>
    %7 = vector.multi_reduction <add>, %6, %cst [0] : vector<8x128xf32> to vector<128xf32>
    %8 = vector.shape_cast %7 : vector<128xf32> to vector<1x128xf32>
    %9 = arith.addf %5, %8 : vector<1x128xf32>
    %c0_6 = arith.constant 0 : index
    %c0_7 = arith.constant 0 : index
    %10 = vector.load %arg3[%c0_6, %c0_7] : memref<1x128xf32, #tpu.memory_space<vmem>>, vector<1x128xf32>
    tpu.vector_store %arg3[%c0_6, %c0_7], %9 {strides = array<i32>} : memref<1x128xf32, #tpu.memory_space<vmem>>, vector<1x128xf32>,
    %c0_8 = arith.constant 0 : index
    %c0_9 = arith.constant 0 : index
    %11 = vector.load %arg4[%c0_8, %c0_9] : memref<1x128xf32, #tpu.memory_space<vmem>>, vector<1x128xf32>
    %cst_10 = arith.constant dense<0.000000e+00> : vector<128xf32>
    %12 = vector.multi_reduction <add>, %3, %cst_10 [0] : vector<8x128xf32> to vector<128xf32>
    %13 = vector.shape_cast %12 : vector<128xf32> to vector<1x128xf32>
    %14 = arith.addf %11, %13 : vector<1x128xf32>
    %c0_11 = arith.constant 0 : index
    %c0_12 = arith.constant 0 : index
    %15 = vector.load %arg4[%c0_11, %c0_12] : memref<1x128xf32, #tpu.memory_space<vmem>>, vector<1x128xf32>
    tpu.vector_store %arg4[%c0_11, %c0_12], %14 {strides = array<i32>} : memref<1x128xf32, #tpu.memory_space<vmem>>, vector<1x128xf32>,
    %c0_13 = arith.constant 0 : index
    %c0_14 = arith.constant 0 : index
    %16 = vector.load %arg5[%c0_13, %c0_14] : memref<1x128xf32, #tpu.memory_space<vmem>>, vector<1x128xf32>
    %cst_15 = arith.constant dense<0.000000e+00> : vector<128xf32>
    %17 = vector.multi_reduction <add>, %4, %cst_15 [0] : vector<8x128xf32> to vector<128xf32>
    %18 = vector.shape_cast %17 : vector<128xf32> to vector<1x128xf32>
    %19 = arith.addf %16, %18 : vector<1x128xf32>
    %c0_16 = arith.constant 0 : index
    %c0_17 = arith.constant 0 : index
    %20 = vector.load %arg5[%c0_16, %c0_17] : memref<1x128xf32, #tpu.memory_space<vmem>>, vector<1x128xf32>
    tpu.vector_store %arg5[%c0_16, %c0_17], %19 {strides = array<i32>} : memref<1x128xf32, #tpu.memory_space<vmem>>, vector<1x128xf32>,
    return
  }
  func.func @transform_0(%arg0: i32) -> (i32, i32) {
    %c0_i32 = arith.constant 0 : i32
    %c0_i32_0 = arith.constant 0 : i32
    return %arg0, %c0_i32 : i32, i32
  }
  func.func @transform_1(%arg0: i32) -> (i32, i32) {
    %c0_i32 = arith.constant 0 : i32
    %c0_i32_0 = arith.constant 0 : i32
    return %arg0, %c0_i32 : i32, i32
  }
  func.func @transform_2(%arg0: i32) -> (i32, i32) {
    %c0_i32 = arith.constant 0 : i32
    %c0_i32_0 = arith.constant 0 : i32
    %c0_i32_1 = arith.constant 0 : i32
    return %c0_i32, %c0_i32_0 : i32, i32
  }
  func.func @transform_3(%arg0: i32) -> (i32, i32) {
    %c0_i32 = arith.constant 0 : i32
    %c0_i32_0 = arith.constant 0 : i32
    %c0_i32_1 = arith.constant 0 : i32
    return %c0_i32, %c0_i32_0 : i32, i32
  }
  func.func @transform_4(%arg0: i32) -> (i32, i32) {
    %c0_i32 = arith.constant 0 : i32
    %c0_i32_0 = arith.constant 0 : i32
    %c0_i32_1 = arith.constant 0 : i32
    return %c0_i32, %c0_i32_0 : i32, i32
  }
}

</mosaic_0001>

<llo_original>
// kernel: tpu_custom_call.1
$region0: #{tpu_custom_call.1}
  #allocation0 [shape = 'u32[]', space=smem, size = 0x4, offset = 0x4, fixed_abs, tag = 'smem constant byte address 0x4 - core index']
  #allocation1 [shape = 'u32[144,128]{1,0:T(1,128)}', space=vmem, size = 0x12000, scoped, tag = 'internal scratch']
  %s0 = inlined_call_operand.hbm [shape: f32[8,128], index: 0, kind: input, shape index: {}]
  %s1 = inlined_call_operand.hbm [shape: f32[8,128], index: 1, kind: input, shape index: {}]
  %s2 = inlined_call_operand.hbm [shape: f32[1,128], index: 2, kind: output, shape index: {0}]
  %s3 = inlined_call_operand.hbm [shape: f32[1,128], index: 3, kind: output, shape index: {1}]
  %s4 = inlined_call_operand.hbm [shape: f32[1,128], index: 4, kind: output, shape index: {2}]
  %5 = xla_tuple %s2, %s3, %s4
  %s6 = sld [smem:[#allocation0]]
  $region46: #{tpu_custom_call.1} parent=0
    _
  %s8 = ssub.s32 1, %s6
  %s9 = scalar_select 0, %s8, %s6
  $region1: #{tpu_custom_call.1} parent=0
    #allocation2 [shape = 'u8[4096]{0}', space=vmem, size = 0x1000, scoped, tag = 'input window, operand 0, single buffered']
    #allocation3 [shape = 's32[1]{0}', space=sflag, size = 0x4, scoped, tag = 'scoped memory for tpu_custom_call.1']
    #allocation4 [shape = 's32[1]{0}', space=sflag, size = 0x4, scoped, tag = 'scoped memory for tpu_custom_call.1']
    #allocation5 [shape = 'u8[4096]{0}', space=vmem, size = 0x1000, scoped, tag = 'input window, operand 1, single buffered']
    #allocation6 [shape = 's32[1]{0}', space=sflag, size = 0x4, scoped, tag = 'scoped memory for tpu_custom_call.1']
    #allocation7 [shape = 'u8[512]{0}', space=vmem, size = 0x400, scoped, tag = 'output window, operand 0, single buffered']
    #allocation8 [shape = 'u8[512]{0}', space=vmem, size = 0x400, scoped, tag = 'output window, operand 1, single buffered']
    #allocation9 [shape = 's32[1]{0}', space=sflag, size = 0x4, scoped, tag = 'scoped memory for tpu_custom_call.1']
    #allocation10 [shape = 'u8[512]{0}', space=vmem, size = 0x400, scoped, tag = 'output window, operand 2, single buffered']
    %10 = vsyncpa [#allocation3], 0
    %11 = vsyncpa [#allocation6], 0
    %12 = vsyncpa [#allocation4], 0
    %13 = vsyncpa [#allocation9], 0
    // Predicated region
    $region2: #{tpu_custom_call.1} parent=1 // pred_check
      _
    $region3: #{tpu_custom_call.1} parent=1 // pred_check_branch
      %15 = sbr.rel (0) target = $region5
    $region4: #{tpu_custom_call.1} parent=1 // pred_region
      %s17 = ssub.s32 128, 128
      %18 = vsyncadd [#allocation3], %s17
      %s20 = sshll.u32 [#allocation2], 4
      %s21 = int_to_ptr.vmem [resolvable:$true] %s20
      %23 = dma.hbm_to_vmem [thread:$0]  %s0, 128, %s21, [#allocation3]
    $region5: #{tpu_custom_call.1} parent=1 // pred_fallthru
      _
    // Predicated region
    $region6: #{tpu_custom_call.1} parent=1 // pred_check
      _
    $region7: #{tpu_custom_call.1} parent=1 // pred_check_branch
      %25 = sbr.rel (0) target = $region9
    $region8: #{tpu_custom_call.1} parent=1 // pred_region
      %s27 = ssub.s32 128, 128
      %28 = vsyncadd [#allocation6], %s27
      %s30 = sshll.u32 [#allocation5], 4
      %s31 = int_to_ptr.vmem [resolvable:$true] %s30
      %33 = dma.hbm_to_vmem [thread:$0]  %s1, 128, %s31, [#allocation6]
    $region9: #{tpu_custom_call.1} parent=1 // pred_fallthru
      _
    // Predicated region
    $region10: #{tpu_custom_call.1} parent=1 // pred_check
      _
    $region11: #{tpu_custom_call.1} parent=1 // pred_check_branch
      %35 = sbr.rel (0) target = $region13
    $region12: #{tpu_custom_call.1} parent=1 // pred_region
      %36 = dma.done [#allocation3], 128
    $region13: #{tpu_custom_call.1} parent=1 // pred_fallthru
      _
    // Predicated region
    $region14: #{tpu_custom_call.1} parent=1 // pred_check
      _
    $region15: #{tpu_custom_call.1} parent=1 // pred_check_branch
      %38 = sbr.rel (0) target = $region17
    $region16: #{tpu_custom_call.1} parent=1 // pred_region
      %39 = dma.done [#allocation6], 128
    $region17: #{tpu_custom_call.1} parent=1 // pred_fallthru
      _
    %p40 = scmp.eq.s32.totalorder 0, 0
    // Predicated region
    $region18: #{tpu_custom_call.1} parent=1 // pred_check
      %p41 = pneg %p40
    $region19: #{tpu_custom_call.1} parent=1 // pred_check_branch
      %43 = sbr.rel (%p41) target = $region21
    $region20: #{tpu_custom_call.1} parent=1 // pred_region
      %44 = vst [vmem:[#allocation7] sm:$0x1] 0.0
      %45 = vst [vmem:[#allocation8] sm:$0x1] 0.0
      %46 = vst [vmem:[#allocation10] sm:$0x1] 0.0
    $region21: #{tpu_custom_call.1} parent=1 // pred_fallthru
      _
    %v47 = vld [vmem:[#allocation2] sm:$0xff]
    %v48 = vld [vmem:[#allocation5] sm:$0xff]
    %v49 = vld [vmem:[#allocation7] sm:$0x1]
    %v50 = vmul.f32 %v47, %v48
    %v51 = vrot.slane %v50, 4
    %v52 = vadd.f32 %v50, %v51
    %v53 = vrot.slane %v52, 2
    %v54 = vadd.f32 %v52, %v53
    %v55 = vrot.slane %v54, 1
    %v56 = vadd.f32 %v54, %v55
    %v57 = vadd.f32 %v49, %v56
    %58 = vst [vmem:[#allocation7] sm:$0x1] %v57
    %v59 = vld [vmem:[#allocation8] sm:$0x1]
    %v60 = vrot.slane %v47, 4
    %v61 = vadd.f32 %v47, %v60
    %v62 = vrot.slane %v61, 2
    %v63 = vadd.f32 %v61, %v62
    %v64 = vrot.slane %v63, 1
    %v65 = vadd.f32 %v63, %v64
    %v66 = vadd.f32 %v59, %v65
    %67 = vst [vmem:[#allocation8] sm:$0x1] %v66
    %v68 = vld [vmem:[#allocation10] sm:$0x1]
    %v69 = vrot.slane %v48, 4
    %v70 = vadd.f32 %v48, %v69
    %v71 = vrot.slane %v70, 2
    %v72 = vadd.f32 %v70, %v71
    %v73 = vrot.slane %v72, 1
    %v74 = vadd.f32 %v72, %v73
    %v75 = vadd.f32 %v68, %v74
    %76 = vst [vmem:[#allocation10] sm:$0x1] %v75
    // Predicated region
    $region22: #{tpu_custom_call.1} parent=1 // pred_check
      _
    $region23: #{tpu_custom_call.1} parent=1 // pred_check_branch
      %78 = sbr.rel (0) target = $region25
    $region24: #{tpu_custom_call.1} parent=1 // pred_region
      %s80 = ssub.s32 16, 16
      %81 = vsyncadd [#allocation4], %s80
      %s83 = sshll.u32 [#allocation7], 4
      %s84 = int_to_ptr.vmem [resolvable:$true] %s83
      %86 = dma.vmem_to_hbm [thread:$0]  %s84, 16, %s2, [#allocation4]
    $region25: #{tpu_custom_call.1} parent=1 // pred_fallthru
      _
    // Predicated region
    $region26: #{tpu_custom_call.1} parent=1 // pred_check
      _
    $region27: #{tpu_custom_call.1} parent=1 // pred_check_branch
      %88 = sbr.rel (0) target = $region29
    $region28: #{tpu_custom_call.1} parent=1 // pred_region
      %s90 = ssub.s32 16, 16
      %91 = vsyncadd [#allocation9], %s90
      %s93 = sshll.u32 [#allocation8], 4
      %s94 = int_to_ptr.vmem [resolvable:$true] %s93
      %96 = dma.vmem_to_hbm [thread:$0]  %s94, 16, %s3, [#allocation9]
    $region29: #{tpu_custom_call.1} parent=1 // pred_fallthru
      _
    // Predicated region
    $region30: #{tpu_custom_call.1} parent=1 // pred_check
      _
    $region31: #{tpu_custom_call.1} parent=1 // pred_check_branch
      %98 = sbr.rel (0) target = $region33
    $region32: #{tpu_custom_call.1} parent=1 // pred_region
      %s100 = ssub.s32 16, 16
      %101 = vsyncadd [#allocation9], %s100
      %s103 = sshll.u32 [#allocation10], 4
      %s104 = int_to_ptr.vmem [resolvable:$true] %s103
      %106 = dma.vmem_to_hbm [thread:$0]  %s104, 16, %s4, [#allocation9]
    $region33: #{tpu_custom_call.1} parent=1 // pred_fallthru
      _
    // Predicated region
    $region34: #{tpu_custom_call.1} parent=1 // pred_check
      _
    $region35: #{tpu_custom_call.1} parent=1 // pred_check_branch
      %108 = sbr.rel (0) target = $region37
    $region36: #{tpu_custom_call.1} parent=1 // pred_region
      %109 = dma.done [#allocation4], 16
    $region37: #{tpu_custom_call.1} parent=1 // pred_fallthru
      _
    // Predicated region
    $region38: #{tpu_custom_call.1} parent=1 // pred_check
      _
    $region39: #{tpu_custom_call.1} parent=1 // pred_check_branch
      %111 = sbr.rel (0) target = $region41
    $region40: #{tpu_custom_call.1} parent=1 // pred_region
      %112 = dma.done [#allocation9], 16
    $region41: #{tpu_custom_call.1} parent=1 // pred_fallthru
      _
    // Predicated region
    $region42: #{tpu_custom_call.1} parent=1 // pred_check
      _
    $region43: #{tpu_custom_call.1} parent=1 // pred_check_branch
      %114 = sbr.rel (0) target = $region45
    $region44: #{tpu_custom_call.1} parent=1 // pred_region
      %115 = dma.done [#allocation9], 16
    $region45: #{tpu_custom_call.1} parent=1 // pred_fallthru
      _
    %116 = vsyncpa [#allocation3], 1
    %117 = vsyncpa [#allocation6], 1
    %118 = vsyncpa [#allocation4], 1
    %119 = vsyncpa [#allocation9], 1

</llo_original>
